<compile_context>
chip_gen: v6e
topology: v6e:2x2x1
jax: 0.10.0
libtpu: 0.0.40
codegen_flags: <defaults>
</compile_context>

<pallas_src>
import functools

import jax
import jax.numpy as jnp
from jax.experimental import pallas as pl
from jax.experimental.pallas import tpu as pltpu

_NEG = -1e30  # additive "minus infinity" that stays NaN-free


# ----------------------------------------------------------------------------
# Fused kernel: conv taps (rolled matmuls) + fused bias/mask + max-pool + ReLU
#               + FC + log_softmax, one batch tile per grid step.
# ----------------------------------------------------------------------------
def _textcnn_fused_kernel(emb_ref, wconv_ref, biasmask_ref, wfc_ref, bfc_ref,
                          out_ref, *, bt, seq_len, k_max):
    # emb_ref:      (bt*S, E)     batch tile, rows folded into matmul M dim
    # wconv_ref:    (Kmax, E, Fp) fused conv weights (zero-padded per branch)
    # biasmask_ref: (S, Fp)       conv bias at valid time positions, -1e30 else
    # wfc_ref:      (Fp, C)       FC weight (zero rows for padded columns)
    # bfc_ref:      (1, C)        FC bias
    # out_ref:      (bt, C)       log-probabilities
    n = bt * seq_len
    f_pad = wconv_ref.shape[2]

    emb = emb_ref[...]                                        # (n, E)
    # Conv taps as shifted matmuls; roll by -k on the XLU overlaps MXU pushes.
    acc = jnp.dot(emb, wconv_ref[0], preferred_element_type=jnp.float32)
    for k in range(1, k_max):                                 # Kmax tiny, static -> unrolled
        x = pltpu.roll(emb, n - k, 0)                         # time shift by -k
        acc = acc + jnp.dot(x, wconv_ref[k],
                            preferred_element_type=jnp.float32)

    # bias + time-validity mask in one add; ReLU commutes with max-pool, so it
    # runs on the pooled (bt, Fp) tensor instead of the (bt*S, Fp) activations.
    act = acc.reshape(bt, seq_len, f_pad) + biasmask_ref[...]
    pooled = jnp.maximum(jnp.max(act, axis=1), 0.0)           # (bt, Fp)

    logits = jnp.dot(pooled, wfc_ref[...],
                     preferred_element_type=jnp.float32) + bfc_ref[...]
    m = jnp.max(logits, axis=1, keepdims=True)
    z = logits - m
    lse = jnp.log(jnp.sum(jnp.exp(z), axis=1, keepdims=True))
    out_ref[...] = (z - lse).astype(out_ref.dtype)            # log_softmax


# ----------------------------------------------------------------------------
# Full TextCNN forward.
# ----------------------------------------------------------------------------
def textcnn_forward(token_ids, params, *, compute_dtype=jnp.float32,
                    batch_tile=256, vmem_block_budget=4 * 1024 * 1024):
    filter_sizes = params["filter_sizes"]
    filter_num = params["filter_num"]
    w_fused = params["conv_w_fused"]                          # (Kmax, E, Fp)
    b_fused = params["conv_b_fused"]                          # (1, Fp)
    fc_w = params["fc_w_padded"]                              # (Fp, C)
    fc_b = params["fc_b"]                                     # (1, C)

    k_max, emb_dim, f_pad = w_fused.shape
    n_classes = fc_w.shape[1]
    batch, seq_len = token_ids.shape
    assert seq_len >= k_max, "sequence shorter than the largest filter"

    # Batch tile: largest multiple of 8 whose (bt*S, E) embedding block stays
    # within the per-buffer VMEM budget (blocks are double-buffered).
    itemsize = jnp.dtype(compute_dtype).itemsize
    row_bytes = max(seq_len * emb_dim * itemsize, 1)
    bt_cap = max(8, (vmem_block_budget // row_bytes) // 8 * 8)
    bt = min(batch_tile, bt_cap)
    if batch <= bt:
        bt = batch
    b_pad = ((batch + bt - 1) // bt) * bt
    if b_pad != batch:
        # pad with token id 0 (padding_idx -> zero embedding rows); sliced off below
        token_ids = jnp.pad(token_ids, ((0, b_pad - batch), (0, 0)))

    # Embedding lookup (XLA glue).
    # TODO(synk): fuse the gather into the kernel (scalar-prefetch token ids +
    # manual DMA row gather) to avoid the (B,S,E) HBM round trip at large vocab.
    emb = jnp.take(params["embedding"], token_ids, axis=0).astype(compute_dtype)
    emb = emb.reshape(b_pad * seq_len, emb_dim)

    # Fused additive bias/validity tensor: positions >= L_k = S-K+1 of branch k
    # -> -1e30, valid positions -> that branch's conv bias.  Padded filter
    # columns stay fully valid with zero bias (they pool to exactly 0).
    mask = jnp.zeros((seq_len, f_pad), jnp.float32)
    for i, ksz in enumerate(filter_sizes):
        valid_len = seq_len - ksz + 1
        col = i * filter_num
        mask = mask.at[valid_len:, col:col + filter_num].set(_NEG)
    bias_mask = mask + b_fused                                # (S, Fp)

    wconv = w_fused.astype(compute_dtype)

    grid = (b_pad // bt,)
    out = pl.pallas_call(
        functools.partial(_textcnn_fused_kernel,
                          bt=bt, seq_len=seq_len, k_max=k_max),
        out_shape=jax.ShapeDtypeStruct((b_pad, n_classes), jnp.float32),
        grid=grid,
        in_specs=[
            pl.BlockSpec((bt * seq_len, emb_dim), lambda i: (i, 0)),
            pl.BlockSpec((k_max, emb_dim, f_pad), lambda i: (0, 0, 0)),
            pl.BlockSpec((seq_len, f_pad), lambda i: (0, 0)),
            pl.BlockSpec((f_pad, n_classes), lambda i: (0, 0)),
            pl.BlockSpec((1, n_classes), lambda i: (0, 0)),
        ],
        out_specs=pl.BlockSpec((bt, n_classes), lambda i: (i, 0)),
        compiler_params=pltpu.CompilerParams(
            dimension_semantics=("parallel",),
        ),
    )(emb, wconv, bias_mask, fc_w, fc_b)
    return out[:batch]


# ----------------------------------------------------------------------------
# Deterministic parameter init matching the module's shapes (weights stored
# pre-transposed: conv (K, E, F) <-> torch (F, 1, K, E); fc (in, out)).
# ----------------------------------------------------------------------------
def init_params(key, vocab_size, emb_dim, filter_sizes, filter_num, output_dim):
    n_branches = len(filter_sizes)
    keys = jax.random.split(key, 1 + 2 * n_branches + 2)
    it = iter(keys)

    embedding = 0.1 * jax.random.normal(next(it), (vocab_size, emb_dim),
                                        jnp.float32)
    embedding = embedding.at[0].set(0.0)        # padding_idx=0 row is zero

    k_max = max(filter_sizes)
    f_total = n_branches * filter_num
    f_pad = ((f_total + 127) // 128) * 128      # lane-dense padded filter axis

    conv_w_fused = jnp.zeros((k_max, emb_dim, f_pad), jnp.float32)
    conv_b_fused = jnp.zeros((1, f_pad), jnp.float32)
    conv_w_list, conv_b_list = [], []
    for i, ksz in enumerate(filter_sizes):
        w = 0.1 * jax.random.normal(next(it), (ksz, emb_dim, filter_num),
                                    jnp.float32)
        b = 0.1 * jax.random.normal(next(it), (1, filter_num), jnp.float32)
        col = i * filter_num
        conv_w_fused = conv_w_fused.at[:ksz, :, col:col + filter_num].set(w)
        conv_b_fused = conv_b_fused.at[:, col:col + filter_num].set(b)
        conv_w_list.append(w)
        conv_b_list.append(b)

    fc_w = 0.1 * jax.random.normal(next(it), (f_total, output_dim), jnp.float32)
    fc_b = 0.1 * jax.random.normal(next(it), (1, output_dim), jnp.float32)
    fc_w_padded = jnp.zeros((f_pad, output_dim), jnp.float32).at[:f_total].set(fc_w)

    return {
        "embedding": embedding,
        "conv_w_fused": conv_w_fused,
        "conv_b_fused": conv_b_fused,
        "conv_w_list": conv_w_list,      # unfused copies for the pure-JAX reference
        "conv_b_list": conv_b_list,
        "fc_w": fc_w,
        "fc_b": fc_b,
        "fc_w_padded": fc_w_padded,
        "filter_sizes": list(filter_sizes),
        "filter_num": filter_num,
    }


# Pure-JAX reference (mirrors the PyTorch forward) for a correctness check.
def reference_forward(token_ids, params):
    emb = jnp.take(params["embedding"], token_ids, axis=0)    # (B, S, E)
    seq_len = token_ids.shape[1]
    fnum = params["filter_num"]
    pooled = []
    for i, ksz in enumerate(params["filter_sizes"]):
        w = params["conv_w_list"][i]                          # (K, E, F)
        b = params["conv_b_list"][i]                          # (1, F)
        valid_len = seq_len - ksz + 1
        acc = jnp.zeros((emb.shape[0], valid_len, fnum), jnp.float32)
        for k in range(ksz):
            acc = acc + jnp.einsum("bse,ef->bsf", emb[:, k:k + valid_len, :], w[k])
        acc = jax.nn.relu(acc + b)
        pooled.append(jnp.max(acc, axis=1))
    cat = jnp.concatenate(pooled, axis=1)                     # (B, 3*F)
    logits = cat @ params["fc_w"] + params["fc_b"]
    return jax.nn.log_softmax(logits, axis=1)


if __name__ == "__main__":
    # Small shapes consistent with the module.
    vocab_size = 50
    emb_dim = 32
    filter_sizes = [2, 3, 4]
    filter_num = 8
    output_dim = 4
    batch = 2
    seq_len = 16

    key = jax.random.PRNGKey(0)
    k_params, k_tokens = jax.random.split(key)

    params = init_params(k_params, vocab_size, emb_dim, filter_sizes,
                         filter_num, output_dim)
    token_ids = jax.random.randint(
        k_tokens, (batch, seq_len), minval=0, maxval=vocab_size, dtype=jnp.int32)

    out = textcnn_forward(token_ids, params)          # f32 operands (reference semantics)
    out = jax.block_until_ready(out)

    assert out.shape == (batch, output_dim)
    # log_softmax rows exponentiate-sum to ~1.
    row_sums = jnp.sum(jnp.exp(out), axis=1)
    assert bool(jnp.all(jnp.abs(row_sums - 1.0) < 1e-4))
    # Matches the unfused pure-JAX reference.
    ref = reference_forward(token_ids, params)
    assert bool(jnp.all(jnp.abs(out - ref) < 1e-4))

    print("KERNEL_OK")
</pallas_src>

<mosaic_0001>
module attributes {stable_mosaic.version = 11 : i64} {
  func.func @_textcnn_fused_kernel(%arg0: i32, %arg1: memref<32x32xf32, #tpu.memory_space<vmem>>, %arg2: memref<4x32x128xf32, #tpu.memory_space<vmem>>, %arg3: memref<16x128xf32, #tpu.memory_space<vmem>>, %arg4: memref<128x4xf32, #tpu.memory_space<vmem>>, %arg5: memref<1x4xf32, #tpu.memory_space<vmem>>, %arg6: memref<2x4xf32, #tpu.memory_space<vmem>>) attributes {dimension_semantics = [#tpu.dimension_semantics<parallel>], iteration_bounds = array<i64: 1>, scalar_prefetch = 0 : i64, scratch_operands = 0 : i64, tpu.core_type = #tpu.core_type<tc>, window_params = [{transform_indices = @transform_0, window_bounds = array<i64: 32, 32>}, {pipeline_mode = #tpu.pipeline_mode<synchronous>, transform_indices = @transform_1, window_bounds = array<i64: 4, 32, 128>}, {pipeline_mode = #tpu.pipeline_mode<synchronous>, transform_indices = @transform_2, window_bounds = array<i64: 16, 128>}, {pipeline_mode = #tpu.pipeline_mode<synchronous>, transform_indices = @transform_3, window_bounds = array<i64: 128, 4>}, {pipeline_mode = #tpu.pipeline_mode<synchronous>, transform_indices = @transform_4, window_bounds = array<i64: 1, 4>}, {transform_indices = @transform_5, window_bounds = array<i64: 2, 4>}]} {
    %c0 = arith.constant 0 : index
    %c0_0 = arith.constant 0 : index
    %0 = vector.load %arg1[%c0, %c0_0] : memref<32x32xf32, #tpu.memory_space<vmem>>, vector<32x32xf32>
    %c0_1 = arith.constant 0 : index
    %c0_2 = arith.constant 0 : index
    %c0_3 = arith.constant 0 : index
    %1 = vector.load %arg2[%c0_1, %c0_2, %c0_3] : memref<4x32x128xf32, #tpu.memory_space<vmem>>, vector<1x32x128xf32>
    %2 = vector.shape_cast %1 : vector<1x32x128xf32> to vector<32x128xf32>
    %cst = arith.constant dense<0.000000e+00> : vector<32x128xf32>
    %3 = tpu.matmul %0, %2, %cst {dimension_numbers = #tpu.dot_dimension_numbers<[1], [0], [0], [1], [0, 0, 1, 1], [], []>} : vector<32x32xf32>, vector<32x128xf32>, vector<32x128xf32> -> vector<32x128xf32>
    %c31_i32 = arith.constant 31 : i32
    %4 = tpu.dynamic_rotate %0 by %c31_i32 dim 0 : vector<32x32xf32>, i32 -> vector<32x32xf32>
    %c1 = arith.constant 1 : index
    %c0_4 = arith.constant 0 : index
    %c0_5 = arith.constant 0 : index
    %5 = vector.load %arg2[%c1, %c0_4, %c0_5] : memref<4x32x128xf32, #tpu.memory_space<vmem>>, vector<1x32x128xf32>
    %6 = vector.shape_cast %5 : vector<1x32x128xf32> to vector<32x128xf32>
    %cst_6 = arith.constant dense<0.000000e+00> : vector<32x128xf32>
    %7 = tpu.matmul %4, %6, %cst_6 {dimension_numbers = #tpu.dot_dimension_numbers<[1], [0], [0], [1], [0, 0, 1, 1], [], []>} : vector<32x32xf32>, vector<32x128xf32>, vector<32x128xf32> -> vector<32x128xf32>
    %8 = arith.addf %3, %7 : vector<32x128xf32>
    %c30_i32 = arith.constant 30 : i32
    %9 = tpu.dynamic_rotate %0 by %c30_i32 dim 0 : vector<32x32xf32>, i32 -> vector<32x32xf32>
    %c2 = arith.constant 2 : index
    %c0_7 = arith.constant 0 : index
    %c0_8 = arith.constant 0 : index
    %10 = vector.load %arg2[%c2, %c0_7, %c0_8] : memref<4x32x128xf32, #tpu.memory_space<vmem>>, vector<1x32x128xf32>
    %11 = vector.shape_cast %10 : vector<1x32x128xf32> to vector<32x128xf32>
    %cst_9 = arith.constant dense<0.000000e+00> : vector<32x128xf32>
    %12 = tpu.matmul %9, %11, %cst_9 {dimension_numbers = #tpu.dot_dimension_numbers<[1], [0], [0], [1], [0, 0, 1, 1], [], []>} : vector<32x32xf32>, vector<32x128xf32>, vector<32x128xf32> -> vector<32x128xf32>
    %13 = arith.addf %8, %12 : vector<32x128xf32>
    %c29_i32 = arith.constant 29 : i32
    %14 = tpu.dynamic_rotate %0 by %c29_i32 dim 0 : vector<32x32xf32>, i32 -> vector<32x32xf32>
    %c3 = arith.constant 3 : index
    %c0_10 = arith.constant 0 : index
    %c0_11 = arith.constant 0 : index
    %15 = vector.load %arg2[%c3, %c0_10, %c0_11] : memref<4x32x128xf32, #tpu.memory_space<vmem>>, vector<1x32x128xf32>
    %16 = vector.shape_cast %15 : vector<1x32x128xf32> to vector<32x128xf32>
    %cst_12 = arith.constant dense<0.000000e+00> : vector<32x128xf32>
    %17 = tpu.matmul %14, %16, %cst_12 {dimension_numbers = #tpu.dot_dimension_numbers<[1], [0], [0], [1], [0, 0, 1, 1], [], []>} : vector<32x32xf32>, vector<32x128xf32>, vector<32x128xf32> -> vector<32x128xf32>
    %18 = arith.addf %13, %17 : vector<32x128xf32>
    %19 = vector.shape_cast %18 : vector<32x128xf32> to vector<2x16x128xf32>
    %c0_13 = arith.constant 0 : index
    %c0_14 = arith.constant 0 : index
    %20 = vector.load %arg3[%c0_13, %c0_14] : memref<16x128xf32, #tpu.memory_space<vmem>>, vector<16x128xf32>
    %21 = vector.shape_cast %20 : vector<16x128xf32> to vector<1x16x128xf32>
    %22 = vector.broadcast %21 : vector<1x16x128xf32> to vector<2x16x128xf32>
    %23 = arith.addf %19, %22 : vector<2x16x128xf32>
    %cst_15 = arith.constant dense<0xFF800000> : vector<2x128xf32>
    %24 = vector.multi_reduction <maximumf>, %23, %cst_15 [1] : vector<2x16x128xf32> to vector<2x128xf32>
    %cst_16 = arith.constant 0.000000e+00 : f32
    %25 = vector.broadcast %cst_16 : f32 to vector<2x128xf32>
    %26 = arith.maximumf %24, %25 : vector<2x128xf32>
    %c0_17 = arith.constant 0 : index
    %c0_18 = arith.constant 0 : index
    %27 = vector.load %arg4[%c0_17, %c0_18] : memref<128x4xf32, #tpu.memory_space<vmem>>, vector<128x4xf32>
    %cst_19 = arith.constant dense<0.000000e+00> : vector<2x4xf32>
    %28 = tpu.matmul %26, %27, %cst_19 {dimension_numbers = #tpu.dot_dimension_numbers<[1], [0], [0], [1], [0, 0, 1, 1], [], []>} : vector<2x128xf32>, vector<128x4xf32>, vector<2x4xf32> -> vector<2x4xf32>
    %c0_20 = arith.constant 0 : index
    %c0_21 = arith.constant 0 : index
    %29 = vector.load %arg5[%c0_20, %c0_21] : memref<1x4xf32, #tpu.memory_space<vmem>>, vector<1x4xf32>
    %30 = vector.broadcast %29 : vector<1x4xf32> to vector<2x4xf32>
    %31 = arith.addf %28, %30 : vector<2x4xf32>
    %cst_22 = arith.constant dense<0xFF800000> : vector<2xf32>
    %32 = vector.multi_reduction <maximumf>, %31, %cst_22 [1] : vector<2x4xf32> to vector<2xf32>
    %33 = vector.shape_cast %32 : vector<2xf32> to vector<2x1xf32>
    %34 = vector.broadcast %33 : vector<2x1xf32> to vector<2x4xf32>
    %35 = arith.subf %31, %34 : vector<2x4xf32>
    %36 = math.exp %35 : vector<2x4xf32>
    %cst_23 = arith.constant dense<0.000000e+00> : vector<2xf32>
    %37 = vector.multi_reduction <add>, %36, %cst_23 [1] : vector<2x4xf32> to vector<2xf32>
    %38 = vector.shape_cast %37 : vector<2xf32> to vector<2x1xf32>
    %39 = math.log %38 : vector<2x1xf32>
    %40 = vector.broadcast %39 : vector<2x1xf32> to vector<2x4xf32>
    %41 = arith.subf %35, %40 : vector<2x4xf32>
    %c0_24 = arith.constant 0 : index
    %c0_25 = arith.constant 0 : index
    %42 = vector.load %arg6[%c0_24, %c0_25] : memref<2x4xf32, #tpu.memory_space<vmem>>, vector<2x4xf32>
    tpu.vector_store %arg6[%c0_24, %c0_25], %41 {strides = array<i32>} : memref<2x4xf32, #tpu.memory_space<vmem>>, vector<2x4xf32>,
    return
  }
  func.func @transform_0(%arg0: i32) -> (i32, i32) {
    %c0_i32 = arith.constant 0 : i32
    %c0_i32_0 = arith.constant 0 : i32
    return %arg0, %c0_i32 : i32, i32
  }
  func.func @transform_1(%arg0: i32) -> (i32, i32, i32) {
    %c0_i32 = arith.constant 0 : i32
    %c0_i32_0 = arith.constant 0 : i32
    %c0_i32_1 = arith.constant 0 : i32
    %c0_i32_2 = arith.constant 0 : i32
    return %c0_i32, %c0_i32_0, %c0_i32_1 : i32, i32, i32
  }
  func.func @transform_2(%arg0: i32) -> (i32, i32) {
    %c0_i32 = arith.constant 0 : i32
    %c0_i32_0 = arith.constant 0 : i32
    %c0_i32_1 = arith.constant 0 : i32
    return %c0_i32, %c0_i32_0 : i32, i32
  }
  func.func @transform_3(%arg0: i32) -> (i32, i32) {
    %c0_i32 = arith.constant 0 : i32
    %c0_i32_0 = arith.constant 0 : i32
    %c0_i32_1 = arith.constant 0 : i32
    return %c0_i32, %c0_i32_0 : i32, i32
  }
  func.func @transform_4(%arg0: i32) -> (i32, i32) {
    %c0_i32 = arith.constant 0 : i32
    %c0_i32_0 = arith.constant 0 : i32
    %c0_i32_1 = arith.constant 0 : i32
    return %c0_i32, %c0_i32_0 : i32, i32
  }
  func.func @transform_5(%arg0: i32) -> (i32, i32) {
    %c0_i32 = arith.constant 0 : i32
    %c0_i32_0 = arith.constant 0 : i32
    return %arg0, %c0_i32 : i32, i32
  }
}

</mosaic_0001>

<llo_original>
// kernel: tpu_custom_call.1
$region0: #{tpu_custom_call.1}
  #allocation0 [shape = 'u32[]', space=smem, size = 0x4, offset = 0x4, fixed_abs, tag = 'smem constant byte address 0x4 - core index']
  #allocation1 [shape = 'u32[144,128]{1,0:T(1,128)}', space=vmem, size = 0x12000, scoped, tag = 'internal scratch']
  %s0 = inlined_call_operand.hbm [shape: f32[32,32], index: 0, kind: input, shape index: {}]
  %s1 = inlined_call_operand.vmem [shape: f32[4,32,128], index: 1, kind: input, shape index: {}]
  %s2 = inlined_call_operand.hbm [shape: f32[16,128], index: 2, kind: input, shape index: {}]
  %s3 = inlined_call_operand.vmem [shape: f32[128,4], index: 3, kind: input, shape index: {}]
  %s4 = inlined_call_operand.vmem [shape: f32[1,4], index: 4, kind: input, shape index: {}]
  %s5 = inlined_call_operand.hbm [shape: f32[2,4], index: 5, kind: output, shape index: {}]
  %s6 = sld [smem:[#allocation0]]
  $region38: #{tpu_custom_call.1} parent=0
    _
  %s8 = ssub.s32 1, %s6
  %s9 = scalar_select 0, %s8, %s6
  $region1: #{tpu_custom_call.1} parent=0
    #allocation2 [shape = 'u8[16384]{0}', space=vmem, size = 0x4000, scoped, tag = 'input window, operand 0, single buffered']
    #allocation3 [shape = 's32[1]{0}', space=sflag, size = 0x4, scoped, tag = 'scoped memory for tpu_custom_call.1']
    #allocation4 [shape = 's32[1]{0}', space=sflag, size = 0x4, scoped, tag = 'scoped memory for tpu_custom_call.1']
    #allocation5 [shape = 'u8[8192]{0}', space=vmem, size = 0x2000, scoped, tag = 'input window, operand 2, single buffered']
    #allocation6 [shape = 's32[1]{0}', space=sflag, size = 0x4, scoped, tag = 'scoped memory for tpu_custom_call.1']
    #allocation7 [shape = 'u8[1024]{0}', space=vmem, size = 0x400, scoped, tag = 'output window, operand 0, single buffered']
    %10 = vsyncpa [#allocation3], 0
    %11 = vsyncpa [#allocation6], 0
    %12 = vsyncpa [#allocation4], 0
    // Predicated region
    $region2: #{tpu_custom_call.1} parent=1 // pred_check
      _
    $region3: #{tpu_custom_call.1} parent=1 // pred_check_branch
      %14 = sbr.rel (0) target = $region5
    $region4: #{tpu_custom_call.1} parent=1 // pred_region
      %s16 = ssub.s32 512, 512
      %17 = vsyncadd [#allocation3], %s16
      %s18 = sshll.u32 [#allocation2], 4
      %s19 = int_to_ptr.vmem [resolvable:$true] %s18
      %24 = dma.hbm_to_vmem [thread:$0]  %s0, 512, %s19, [#allocation3], 128, 128, 8
    $region5: #{tpu_custom_call.1} parent=1 // pred_fallthru
      _
    // Predicated region
    $region6: #{tpu_custom_call.1} parent=1 // pred_check
      _
    $region7: #{tpu_custom_call.1} parent=1 // pred_check_branch
      %26 = sbr.rel (0) target = $region9
    $region8: #{tpu_custom_call.1} parent=1 // pred_region
      _
    $region9: #{tpu_custom_call.1} parent=1 // pred_fallthru
      _
    // Predicated region
    $region10: #{tpu_custom_call.1} parent=1 // pred_check
      _
    $region11: #{tpu_custom_call.1} parent=1 // pred_check_branch
      %28 = sbr.rel (0) target = $region13
    $region12: #{tpu_custom_call.1} parent=1 // pred_region
      %s30 = ssub.s32 256, 256
      %31 = vsyncadd [#allocation6], %s30
      %s32 = sshll.u32 [#allocation5], 4
      %s33 = int_to_ptr.vmem [resolvable:$true] %s32
      %38 = dma.hbm_to_vmem [thread:$0]  %s2, 256, %s33, [#allocation6], 128, 128, 8
    $region13: #{tpu_custom_call.1} parent=1 // pred_fallthru
      _
    // Predicated region
    $region14: #{tpu_custom_call.1} parent=1 // pred_check
      _
    $region15: #{tpu_custom_call.1} parent=1 // pred_check_branch
      %40 = sbr.rel (0) target = $region17
    $region16: #{tpu_custom_call.1} parent=1 // pred_region
      _
    $region17: #{tpu_custom_call.1} parent=1 // pred_fallthru
      _
    // Predicated region
    $region18: #{tpu_custom_call.1} parent=1 // pred_check
      _
    $region19: #{tpu_custom_call.1} parent=1 // pred_check_branch
      %42 = sbr.rel (0) target = $region21
    $region20: #{tpu_custom_call.1} parent=1 // pred_region
      _
    $region21: #{tpu_custom_call.1} parent=1 // pred_fallthru
      _
    // Predicated region
    $region22: #{tpu_custom_call.1} parent=1 // pred_check
      _
    $region23: #{tpu_custom_call.1} parent=1 // pred_check_branch
      %44 = sbr.rel (0) target = $region25
    $region24: #{tpu_custom_call.1} parent=1 // pred_region
      %45 = dma.done [#allocation3], 512
    $region25: #{tpu_custom_call.1} parent=1 // pred_fallthru
      _
    // Predicated region
    $region26: #{tpu_custom_call.1} parent=1 // pred_check
      _
    $region27: #{tpu_custom_call.1} parent=1 // pred_check_branch
      %47 = sbr.rel (0) target = $region29
    $region28: #{tpu_custom_call.1} parent=1 // pred_region
      %48 = dma.done [#allocation6], 256
    $region29: #{tpu_custom_call.1} parent=1 // pred_fallthru
      _
    %v49 = vld [vmem:[#allocation2] sm:$0xff]
    %v50 = vld [vmem:[#allocation2 + $0x8] sm:$0xff]
    %v51 = vld [vmem:[#allocation2 + $0x10] sm:$0xff]
    %v52 = vld [vmem:[#allocation2 + $0x18] sm:$0xff]
    %v53 = vld [vmem:[%s1] sm:$0xff]
    %v54 = vld [vmem:[%s1 + $0x8] sm:$0xff]
    %v55 = vld [vmem:[%s1 + $0x10] sm:$0xff]
    %v56 = vld [vmem:[%s1 + $0x18] sm:$0xff]
    %v57 = vrot.slane %v49, 1
    %v58 = vrot.slane %v50, 1
    %v59 = vrot.slane %v51, 1
    %v60 = vrot.slane %v52, 1
    %v61 = vlaneseq
    %v62 = vshrl.u32 %v61, 7
    %vm63 = vcmp.lt.s32.totalorder %v62, 7
    %v64 = vsel %vm63, %v59, %v60
    %v65 = vsel %vm63, %v58, %v59
    %v66 = vsel %vm63, %v57, %v58
    %v67 = vsel %vm63, %v60, %v57
    %s68 = scalar_lea.vmem %s1, 32
    %v69 = vld [vmem:[%s68] sm:$0xff]
    %v70 = vld [vmem:[%s68 + $0x8] sm:$0xff]
    %v71 = vld [vmem:[%s68 + $0x10] sm:$0xff]
    %v72 = vld [vmem:[%s68 + $0x18] sm:$0xff]
    %vm73 = vcmask 261120
    %v75 = vsel %vm73, %v66, 0
    %v78 = vsel %vm73, %v65, 0
    %v81 = vsel %vm73, %v64, 0
    %v84 = vsel %vm73, %v67, 0
    %86 = vmatprep.subr.mxu0 0.0
    %87 = vmatpush1.msra.mxu0 0.0
    %88 = vmatprep.subr.mxu0 0.0
    %89 = vmatpush1.msra.mxu0 0.0
    %90 = vmatprep.subr.mxu0 0.0
    %91 = vmatpush1.msra.mxu0 0.0
    %92 = vmatprep.subr.mxu0 0.0
    %93 = vmatpush1.msra.mxu0 0.0
    %94 = vmatprep.subr.mxu0 0.0
    %95 = vmatpush1.msra.mxu0 0.0
    %96 = vmatprep.subr.mxu0 0.0
    %97 = vmatpush1.msra.mxu0 0.0
    %98 = vmatprep.subr.mxu0 0.0
    %99 = vmatpush1.msra.mxu0 0.0
    %100 = vmatprep.subr.mxu0 0.0
    %101 = vmatpush1.msra.mxu0 0.0
    %102 = vmatprep.subr.mxu0 0.0
    %103 = vmatpush1.msra.mxu0 0.0
    %104 = vmatprep.subr.mxu0 0.0
    %105 = vmatpush1.msra.mxu0 0.0
    %106 = vmatprep.subr.mxu0 0.0
    %107 = vmatpush1.msra.mxu0 0.0
    %108 = vmatprep.subr.mxu0 0.0
    %109 = vmatpush1.msra.mxu0 0.0
    %110 = vmatprep.subr.mxu0 0.0
    %111 = vmatpush1.msra.mxu0 %v72
    %112 = vmatprep.subr.mxu0 0.0
    %113 = vmatpush1.msra.mxu0 %v71
    %114 = vmatprep.subr.mxu0 0.0
    %115 = vmatpush1.msra.mxu0 %v70
    %116 = vmatprep.subr.mxu0 0.0
    %117 = vmatpush1.msra.mxu0 %v69
    %118 = vmatprep.subr.mxu0 0.0
    %119 = vmatpush2.msra.mxu0 0.0
    %120 = vmatprep.subr.mxu0 0.0
    %121 = vmatpush2.msra.mxu0 0.0
    %122 = vmatprep.subr.mxu0 0.0
    %123 = vmatpush2.msra.mxu0 0.0
    %124 = vmatprep.subr.mxu0 0.0
    %125 = vmatpush2.msra.mxu0 0.0
    %126 = vmatprep.subr.mxu0 0.0
    %127 = vmatpush2.msra.mxu0 0.0
    %128 = vmatprep.subr.mxu0 0.0
    %129 = vmatpush2.msra.mxu0 0.0
    %130 = vmatprep.subr.mxu0 0.0
    %131 = vmatpush2.msra.mxu0 0.0
    %132 = vmatprep.subr.mxu0 0.0
    %133 = vmatpush2.msra.mxu0 0.0
    %134 = vmatprep.subr.mxu0 0.0
    %135 = vmatpush2.msra.mxu0 0.0
    %136 = vmatprep.subr.mxu0 0.0
    %137 = vmatpush2.msra.mxu0 0.0
    %138 = vmatprep.subr.mxu0 0.0
    %139 = vmatpush2.msra.mxu0 0.0
    %140 = vmatprep.subr.mxu0 0.0
    %141 = vmatpush2.msra.mxu0 0.0
    %142 = vmatprep.subr.mxu0 0.0
    %143 = vmatpush2.msra.mxu0 0.0
    %144 = vmatprep.subr.mxu0 0.0
    %145 = vmatpush2.msra.mxu0 0.0
    %146 = vmatprep.subr.mxu0 0.0
    %147 = vmatpush2.msra.mxu0 0.0
    %148 = vmatprep.subr.mxu0 0.0
    %149 = vmatpush2.msra.mxu0 0.0
    %150 = vmatprep.mubr.f32.mxu0 0.0
    %151 = vmatmul.mubr.f32.gmra.mxu0 %v75
    %v152 = vpop.f32.mrf.mxu0
    %v153 = vadd.f32 0.0, %v152
    %v154 = vpop.f32.mrf.mxu0
    %155 = vmatprep.mubr.f32.mxu0 0.0
    %156 = vmatmul.mubr.f32.gmra.mxu0 %v78
    %v157 = vpop.f32.mrf.mxu0
    %v158 = vadd.f32 0.0, %v157
    %v159 = vpop.f32.mrf.mxu0
    %160 = vmatprep.mubr.f32.mxu0 0.0
    %161 = vmatmul.mubr.f32.gmra.mxu0 %v81
    %v162 = vpop.f32.mrf.mxu0
    %v163 = vadd.f32 0.0, %v162
    %v164 = vpop.f32.mrf.mxu0
    %165 = vmatprep.mubr.f32.mxu0 0.0
    %166 = vmatmul.mubr.f32.gmra.mxu0 %v84
    %v167 = vpop.f32.mrf.mxu0
    %v168 = vadd.f32 0.0, %v167
    %v169 = vpop.f32.mrf.mxu0
    %170 = vdwg.mxu0
    %v172 = vsel %vm73, %v49, 0
    %v175 = vsel %vm73, %v50, 0
    %v178 = vsel %vm73, %v51, 0
    %v181 = vsel %vm73, %v52, 0
    %183 = vmatprep.subr.mxu0 0.0
    %184 = vmatpush1.msra.mxu0 0.0
    %185 = vmatprep.subr.mxu0 0.0
    %186 = vmatpush1.msra.mxu0 0.0
    %187 = vmatprep.subr.mxu0 0.0
    %188 = vmatpush1.msra.mxu0 0.0
    %189 = vmatprep.subr.mxu0 0.0
    %190 = vmatpush1.msra.mxu0 0.0
    %191 = vmatprep.subr.mxu0 0.0
    %192 = vmatpush1.msra.mxu0 0.0
    %193 = vmatprep.subr.mxu0 0.0
    %194 = vmatpush1.msra.mxu0 0.0
    %195 = vmatprep.subr.mxu0 0.0
    %196 = vmatpush1.msra.mxu0 0.0
    %197 = vmatprep.subr.mxu0 0.0
    %198 = vmatpush1.msra.mxu0 0.0
    %199 = vmatprep.subr.mxu0 0.0
    %200 = vmatpush1.msra.mxu0 0.0
    %201 = vmatprep.subr.mxu0 0.0
    %202 = vmatpush1.msra.mxu0 0.0
    %203 = vmatprep.subr.mxu0 0.0
    %204 = vmatpush1.msra.mxu0 0.0
    %205 = vmatprep.subr.mxu0 0.0
    %206 = vmatpush1.msra.mxu0 0.0
    %207 = vmatprep.subr.mxu0 0.0
    %208 = vmatpush1.msra.mxu0 %v56
    %209 = vmatprep.subr.mxu0 0.0
    %210 = vmatpush1.msra.mxu0 %v55
    %211 = vmatprep.subr.mxu0 0.0
    %212 = vmatpush1.msra.mxu0 %v54
    %213 = vmatprep.subr.mxu0 0.0
    %214 = vmatpush1.msra.mxu0 %v53
    %215 = vmatprep.subr.mxu0 0.0
    %216 = vmatpush2.msra.mxu0 0.0
    %217 = vmatprep.subr.mxu0 0.0
    %218 = vmatpush2.msra.mxu0 0.0
    %219 = vmatprep.subr.mxu0 0.0
    %220 = vmatpush2.msra.mxu0 0.0
    %221 = vmatprep.subr.mxu0 0.0
    %222 = vmatpush2.msra.mxu0 0.0
    %223 = vmatprep.subr.mxu0 0.0
    %224 = vmatpush2.msra.mxu0 0.0
    %225 = vmatprep.subr.mxu0 0.0
    %226 = vmatpush2.msra.mxu0 0.0
    %227 = vmatprep.subr.mxu0 0.0
    %228 = vmatpush2.msra.mxu0 0.0
    %229 = vmatprep.subr.mxu0 0.0
    %230 = vmatpush2.msra.mxu0 0.0
    %231 = vmatprep.subr.mxu0 0.0
    %232 = vmatpush2.msra.mxu0 0.0
    %233 = vmatprep.subr.mxu0 0.0
    %234 = vmatpush2.msra.mxu0 0.0
    %235 = vmatprep.subr.mxu0 0.0
    %236 = vmatpush2.msra.mxu0 0.0
    %237 = vmatprep.subr.mxu0 0.0
    %238 = vmatpush2.msra.mxu0 0.0
    %239 = vmatprep.subr.mxu0 0.0
    %240 = vmatpush2.msra.mxu0 0.0
    %241 = vmatprep.subr.mxu0 0.0
    %242 = vmatpush2.msra.mxu0 0.0
    %243 = vmatprep.subr.mxu0 0.0
    %244 = vmatpush2.msra.mxu0 0.0
    %245 = vmatprep.subr.mxu0 0.0
    %246 = vmatpush2.msra.mxu0 0.0
    %247 = vmatprep.mubr.f32.mxu0 0.0
    %248 = vmatmul.mubr.f32.gmra.mxu0 %v172
    %v249 = vpop.f32.mrf.mxu0
    %v250 = vadd.f32 %v153, %v249
    %v251 = vpop.f32.mrf.mxu0
    %252 = vmatprep.mubr.f32.mxu0 0.0
    %253 = vmatmul.mubr.f32.gmra.mxu0 %v175
    %v254 = vpop.f32.mrf.mxu0
    %v255 = vadd.f32 %v158, %v254
    %v256 = vpop.f32.mrf.mxu0
    %257 = vmatprep.mubr.f32.mxu0 0.0
    %258 = vmatmul.mubr.f32.gmra.mxu0 %v178
    %v259 = vpop.f32.mrf.mxu0
    %v260 = vadd.f32 %v163, %v259
    %v261 = vpop.f32.mrf.mxu0
    %262 = vmatprep.mubr.f32.mxu0 0.0
    %263 = vmatmul.mubr.f32.gmra.mxu0 %v181
    %v264 = vpop.f32.mrf.mxu0
    %v265 = vadd.f32 %v168, %v264
    %v266 = vpop.f32.mrf.mxu0
    %267 = vdwg.mxu0
    %v268 = vrot.slane %v49, 2
    %v269 = vrot.slane %v50, 2
    %v270 = vrot.slane %v51, 2
    %v271 = vrot.slane %v52, 2
    %vm272 = vcmp.lt.s32.totalorder %v62, 6
    %v273 = vsel %vm272, %v270, %v271
    %v274 = vsel %vm272, %v269, %v270
    %v275 = vsel %vm272, %v268, %v269
    %v276 = vsel %vm272, %v271, %v268
    %s277 = scalar_lea.vmem %s1, 64
    %v278 = vld [vmem:[%s277] sm:$0xff]
    %v279 = vld [vmem:[%s277 + $0x8] sm:$0xff]
    %v280 = vld [vmem:[%s277 + $0x10] sm:$0xff]
    %v281 = vld [vmem:[%s277 + $0x18] sm:$0xff]
    %v283 = vsel %vm73, %v275, 0
    %v286 = vsel %vm73, %v274, 0
    %v289 = vsel %vm73, %v273, 0
    %v292 = vsel %vm73, %v276, 0
    %294 = vmatprep.subr.mxu0 0.0
    %295 = vmatpush1.msra.mxu0 0.0
    %296 = vmatprep.subr.mxu0 0.0
    %297 = vmatpush1.msra.mxu0 0.0
    %298 = vmatprep.subr.mxu0 0.0
    %299 = vmatpush1.msra.mxu0 0.0
    %300 = vmatprep.subr.mxu0 0.0
    %301 = vmatpush1.msra.mxu0 0.0
    %302 = vmatprep.subr.mxu0 0.0
    %303 = vmatpush1.msra.mxu0 0.0
    %304 = vmatprep.subr.mxu0 0.0
    %305 = vmatpush1.msra.mxu0 0.0
    %306 = vmatprep.subr.mxu0 0.0
    %307 = vmatpush1.msra.mxu0 0.0
    %308 = vmatprep.subr.mxu0 0.0
    %309 = vmatpush1.msra.mxu0 0.0
    %310 = vmatprep.subr.mxu0 0.0
    %311 = vmatpush1.msra.mxu0 0.0
    %312 = vmatprep.subr.mxu0 0.0
    %313 = vmatpush1.msra.mxu0 0.0
    %314 = vmatprep.subr.mxu0 0.0
    %315 = vmatpush1.msra.mxu0 0.0
    %316 = vmatprep.subr.mxu0 0.0
    %317 = vmatpush1.msra.mxu0 0.0
    %318 = vmatprep.subr.mxu0 0.0
    %319 = vmatpush1.msra.mxu0 %v281
    %320 = vmatprep.subr.mxu0 0.0
    %321 = vmatpush1.msra.mxu0 %v280
    %322 = vmatprep.subr.mxu0 0.0
    %323 = vmatpush1.msra.mxu0 %v279
    %324 = vmatprep.subr.mxu0 0.0
    %325 = vmatpush1.msra.mxu0 %v278
    %326 = vmatprep.subr.mxu0 0.0
    %327 = vmatpush2.msra.mxu0 0.0
    %328 = vmatprep.subr.mxu0 0.0
    %329 = vmatpush2.msra.mxu0 0.0
    %330 = vmatprep.subr.mxu0 0.0
    %331 = vmatpush2.msra.mxu0 0.0
    %332 = vmatprep.subr.mxu0 0.0
    %333 = vmatpush2.msra.mxu0 0.0
    %334 = vmatprep.subr.mxu0 0.0
    %335 = vmatpush2.msra.mxu0 0.0
    %336 = vmatprep.subr.mxu0 0.0
    %337 = vmatpush2.msra.mxu0 0.0
    %338 = vmatprep.subr.mxu0 0.0
    %339 = vmatpush2.msra.mxu0 0.0
    %340 = vmatprep.subr.mxu0 0.0
    %341 = vmatpush2.msra.mxu0 0.0
    %342 = vmatprep.subr.mxu0 0.0
    %343 = vmatpush2.msra.mxu0 0.0
    %344 = vmatprep.subr.mxu0 0.0
    %345 = vmatpush2.msra.mxu0 0.0
    %346 = vmatprep.subr.mxu0 0.0
    %347 = vmatpush2.msra.mxu0 0.0
    %348 = vmatprep.subr.mxu0 0.0
    %349 = vmatpush2.msra.mxu0 0.0
    %350 = vmatprep.subr.mxu0 0.0
    %351 = vmatpush2.msra.mxu0 0.0
    %352 = vmatprep.subr.mxu0 0.0
    %353 = vmatpush2.msra.mxu0 0.0
    %354 = vmatprep.subr.mxu0 0.0
    %355 = vmatpush2.msra.mxu0 0.0
    %356 = vmatprep.subr.mxu0 0.0
    %357 = vmatpush2.msra.mxu0 0.0
    %358 = vmatprep.mubr.f32.mxu0 0.0
    %359 = vmatmul.mubr.f32.gmra.mxu0 %v283
    %v360 = vpop.f32.mrf.mxu0
    %v361 = vadd.f32 0.0, %v360
    %v362 = vpop.f32.mrf.mxu0
    %363 = vmatprep.mubr.f32.mxu0 0.0
    %364 = vmatmul.mubr.f32.gmra.mxu0 %v286
    %v365 = vpop.f32.mrf.mxu0
    %v366 = vadd.f32 0.0, %v365
    %v367 = vpop.f32.mrf.mxu0
    %368 = vmatprep.mubr.f32.mxu0 0.0
    %369 = vmatmul.mubr.f32.gmra.mxu0 %v289
    %v370 = vpop.f32.mrf.mxu0
    %v371 = vadd.f32 0.0, %v370
    %v372 = vpop.f32.mrf.mxu0
    %373 = vmatprep.mubr.f32.mxu0 0.0
    %374 = vmatmul.mubr.f32.gmra.mxu0 %v292
    %v375 = vpop.f32.mrf.mxu0
    %v376 = vadd.f32 0.0, %v375
    %v377 = vpop.f32.mrf.mxu0
    %378 = vdwg.mxu0
    %v379 = vadd.f32 %v250, %v361
    %v380 = vadd.f32 %v255, %v366
    %v381 = vadd.f32 %v260, %v371
    %v382 = vadd.f32 %v265, %v376
    %v383 = vrot.slane %v49, 3
    %v384 = vrot.slane %v50, 3
    %v385 = vrot.slane %v51, 3
    %v386 = vrot.slane %v52, 3
    %vm387 = vcmp.lt.s32.totalorder %v62, 5
    %v388 = vsel %vm387, %v385, %v386
    %v389 = vsel %vm387, %v384, %v385
    %v390 = vsel %vm387, %v383, %v384
    %v391 = vsel %vm387, %v386, %v383
    %s392 = scalar_lea.vmem %s1, 96
    %v393 = vld [vmem:[%s392] sm:$0xff]
    %v394 = vld [vmem:[%s392 + $0x8] sm:$0xff]
    %v395 = vld [vmem:[%s392 + $0x10] sm:$0xff]
    %v396 = vld [vmem:[%s392 + $0x18] sm:$0xff]
    %v398 = vsel %vm73, %v390, 0
    %v401 = vsel %vm73, %v389, 0
    %v404 = vsel %vm73, %v388, 0
    %v407 = vsel %vm73, %v391, 0
    %409 = vmatprep.subr.mxu0 0.0
    %410 = vmatpush1.msra.mxu0 0.0
    %411 = vmatprep.subr.mxu0 0.0
    %412 = vmatpush1.msra.mxu0 0.0
    %413 = vmatprep.subr.mxu0 0.0
    %414 = vmatpush1.msra.mxu0 0.0
    %415 = vmatprep.subr.mxu0 0.0
    %416 = vmatpush1.msra.mxu0 0.0
    %417 = vmatprep.subr.mxu0 0.0
    %418 = vmatpush1.msra.mxu0 0.0
    %419 = vmatprep.subr.mxu0 0.0
    %420 = vmatpush1.msra.mxu0 0.0
    %421 = vmatprep.subr.mxu0 0.0
    %422 = vmatpush1.msra.mxu0 0.0
    %423 = vmatprep.subr.mxu0 0.0
    %424 = vmatpush1.msra.mxu0 0.0
    %425 = vmatprep.subr.mxu0 0.0
    %426 = vmatpush1.msra.mxu0 0.0
    %427 = vmatprep.subr.mxu0 0.0
    %428 = vmatpush1.msra.mxu0 0.0
    %429 = vmatprep.subr.mxu0 0.0
    %430 = vmatpush1.msra.mxu0 0.0
    %431 = vmatprep.subr.mxu0 0.0
    %432 = vmatpush1.msra.mxu0 0.0
    %433 = vmatprep.subr.mxu0 0.0
    %434 = vmatpush1.msra.mxu0 %v396
    %435 = vmatprep.subr.mxu0 0.0
    %436 = vmatpush1.msra.mxu0 %v395
    %437 = vmatprep.subr.mxu0 0.0
    %438 = vmatpush1.msra.mxu0 %v394
    %439 = vmatprep.subr.mxu0 0.0
    %440 = vmatpush1.msra.mxu0 %v393
    %441 = vmatprep.subr.mxu0 0.0
    %442 = vmatpush2.msra.mxu0 0.0
    %443 = vmatprep.subr.mxu0 0.0
    %444 = vmatpush2.msra.mxu0 0.0
    %445 = vmatprep.subr.mxu0 0.0
    %446 = vmatpush2.msra.mxu0 0.0
    %447 = vmatprep.subr.mxu0 0.0
    %448 = vmatpush2.msra.mxu0 0.0
    %449 = vmatprep.subr.mxu0 0.0
    %450 = vmatpush2.msra.mxu0 0.0
    %451 = vmatprep.subr.mxu0 0.0
    %452 = vmatpush2.msra.mxu0 0.0
    %453 = vmatprep.subr.mxu0 0.0
    %454 = vmatpush2.msra.mxu0 0.0
    %455 = vmatprep.subr.mxu0 0.0
    %456 = vmatpush2.msra.mxu0 0.0
    %457 = vmatprep.subr.mxu0 0.0
    %458 = vmatpush2.msra.mxu0 0.0
    %459 = vmatprep.subr.mxu0 0.0
    %460 = vmatpush2.msra.mxu0 0.0
    %461 = vmatprep.subr.mxu0 0.0
    %462 = vmatpush2.msra.mxu0 0.0
    %463 = vmatprep.subr.mxu0 0.0
    %464 = vmatpush2.msra.mxu0 0.0
    %465 = vmatprep.subr.mxu0 0.0
    %466 = vmatpush2.msra.mxu0 0.0
    %467 = vmatprep.subr.mxu0 0.0
    %468 = vmatpush2.msra.mxu0 0.0
    %469 = vmatprep.subr.mxu0 0.0
    %470 = vmatpush2.msra.mxu0 0.0
    %471 = vmatprep.subr.mxu0 0.0
    %472 = vmatpush2.msra.mxu0 0.0
    %473 = vmatprep.mubr.f32.mxu0 0.0
    %474 = vmatmul.mubr.f32.gmra.mxu0 %v398
    %v475 = vpop.f32.mrf.mxu0
    %v476 = vadd.f32 0.0, %v475
    %v477 = vpop.f32.mrf.mxu0
    %478 = vmatprep.mubr.f32.mxu0 0.0
    %479 = vmatmul.mubr.f32.gmra.mxu0 %v401
    %v480 = vpop.f32.mrf.mxu0
    %v481 = vadd.f32 0.0, %v480
    %v482 = vpop.f32.mrf.mxu0
    %483 = vmatprep.mubr.f32.mxu0 0.0
    %484 = vmatmul.mubr.f32.gmra.mxu0 %v404
    %v485 = vpop.f32.mrf.mxu0
    %v486 = vadd.f32 0.0, %v485
    %v487 = vpop.f32.mrf.mxu0
    %488 = vmatprep.mubr.f32.mxu0 0.0
    %489 = vmatmul.mubr.f32.gmra.mxu0 %v407
    %v490 = vpop.f32.mrf.mxu0
    %v491 = vadd.f32 0.0, %v490
    %v492 = vpop.f32.mrf.mxu0
    %493 = vdwg.mxu0
    %v494 = vadd.f32 %v379, %v476
    %v495 = vadd.f32 %v380, %v481
    %v496 = vadd.f32 %v381, %v486
    %v497 = vadd.f32 %v382, %v491
    %v498 = vld [vmem:[#allocation5] sm:$0xff]
    %v499 = vld [vmem:[#allocation5 + $0x8] sm:$0xff]
    %v500 = vadd.f32 %v494, %v498
    %v501 = vadd.f32 %v495, %v499
    %v502 = vadd.f32 %v496, %v498
    %v503 = vadd.f32 %v497, %v499
    %v504 = vmax.f32 %v500, %v501
    %v505 = vrot.slane %v504, 4
    %v506 = vmax.f32 %v504, %v505
    %v507 = vrot.slane %v506, 2
    %v508 = vmax.f32 %v506, %v507
    %v509 = vrot.slane %v508, 1
    %v510 = vmax.f32 %v508, %v509
    %v511 = vmax.f32 %v502, %v503
    %v512 = vrot.slane %v511, 4
    %v513 = vmax.f32 %v511, %v512
    %v514 = vrot.slane %v513, 2
    %v515 = vmax.f32 %v513, %v514
    %v516 = vrot.slane %v515, 1
    %v517 = vmax.f32 %v515, %v516
    %v518 = vmax.f32 %v510, 0.0
    %v519 = vmax.f32 %v517, 0.0
    %v520 = vld [vmem:[%s3] sm:$0xff]
    %v521 = vld [vmem:[%s3 + $0x8] sm:$0xff]
    %v522 = vld [vmem:[%s3 + $0x10] sm:$0xff]
    %v523 = vld [vmem:[%s3 + $0x18] sm:$0xff]
    %v524 = vld [vmem:[%s3 + $0x20] sm:$0xff]
    %v525 = vld [vmem:[%s3 + $0x28] sm:$0xff]
    %v526 = vld [vmem:[%s3 + $0x30] sm:$0xff]
    %v527 = vld [vmem:[%s3 + $0x38] sm:$0xff]
    %v528 = vld [vmem:[%s3 + $0x40] sm:$0xff]
    %v529 = vld [vmem:[%s3 + $0x48] sm:$0xff]
    %v530 = vld [vmem:[%s3 + $0x50] sm:$0xff]
    %v531 = vld [vmem:[%s3 + $0x58] sm:$0xff]
    %v532 = vld [vmem:[%s3 + $0x60] sm:$0xff]
    %v533 = vld [vmem:[%s3 + $0x68] sm:$0xff]
    %v534 = vld [vmem:[%s3 + $0x70] sm:$0xff]
    %v535 = vld [vmem:[%s3 + $0x78] sm:$0xff]
    %v536 = vld [vmem:[%s4] sm:$0x1]
    %v538 = vlaneseq
    %v539 = vshrl.u32 %v538, 7
    %v540 = vsub.s32 0, %v539
    %v541 = vrot.slane %v536, %v540
    %vm545 = vcmask 1041409
    %v546 = vsel %vm545, %v519, %v518
    %548 = vmatprep.subr.mxu0 0.0
    %549 = vmatpush1.msra.mxu0 %v535
    %550 = vmatprep.subr.mxu0 0.0
    %551 = vmatpush1.msra.mxu0 %v534
    %552 = vmatprep.subr.mxu0 0.0
    %553 = vmatpush1.msra.mxu0 %v533
    %554 = vmatprep.subr.mxu0 0.0
    %555 = vmatpush1.msra.mxu0 %v532
    %556 = vmatprep.subr.mxu0 0.0
    %557 = vmatpush1.msra.mxu0 %v531
    %558 = vmatprep.subr.mxu0 0.0
    %559 = vmatpush1.msra.mxu0 %v530
    %560 = vmatprep.subr.mxu0 0.0
    %561 = vmatpush1.msra.mxu0 %v529
    %562 = vmatprep.subr.mxu0 0.0
    %563 = vmatpush1.msra.mxu0 %v528
    %564 = vmatprep.subr.mxu0 0.0
    %565 = vmatpush1.msra.mxu0 %v527
    %566 = vmatprep.subr.mxu0 0.0
    %567 = vmatpush1.msra.mxu0 %v526
    %568 = vmatprep.subr.mxu0 0.0
    %569 = vmatpush1.msra.mxu0 %v525
    %570 = vmatprep.subr.mxu0 0.0
    %571 = vmatpush1.msra.mxu0 %v524
    %572 = vmatprep.subr.mxu0 0.0
    %573 = vmatpush1.msra.mxu0 %v523
    %574 = vmatprep.subr.mxu0 0.0
    %575 = vmatpush1.msra.mxu0 %v522
    %576 = vmatprep.subr.mxu0 0.0
    %577 = vmatpush1.msra.mxu0 %v521
    %578 = vmatprep.subr.mxu0 0.0
    %579 = vmatpush1.msra.mxu0 %v520
    %580 = vmatprep.subr.mxu0 0.0
    %581 = vmatpush2.msra.mxu0 0.0
    %582 = vmatprep.subr.mxu0 0.0
    %583 = vmatpush2.msra.mxu0 0.0
    %584 = vmatprep.subr.mxu0 0.0
    %585 = vmatpush2.msra.mxu0 0.0
    %586 = vmatprep.subr.mxu0 0.0
    %587 = vmatpush2.msra.mxu0 0.0
    %588 = vmatprep.subr.mxu0 0.0
    %589 = vmatpush2.msra.mxu0 0.0
    %590 = vmatprep.subr.mxu0 0.0
    %591 = vmatpush2.msra.mxu0 0.0
    %592 = vmatprep.subr.mxu0 0.0
    %593 = vmatpush2.msra.mxu0 0.0
    %594 = vmatprep.subr.mxu0 0.0
    %595 = vmatpush2.msra.mxu0 0.0
    %596 = vmatprep.subr.mxu0 0.0
    %597 = vmatpush2.msra.mxu0 0.0
    %598 = vmatprep.subr.mxu0 0.0
    %599 = vmatpush2.msra.mxu0 0.0
    %600 = vmatprep.subr.mxu0 0.0
    %601 = vmatpush2.msra.mxu0 0.0
    %602 = vmatprep.subr.mxu0 0.0
    %603 = vmatpush2.msra.mxu0 0.0
    %604 = vmatprep.subr.mxu0 0.0
    %605 = vmatpush2.msra.mxu0 0.0
    %606 = vmatprep.subr.mxu0 0.0
    %607 = vmatpush2.msra.mxu0 0.0
    %608 = vmatprep.subr.mxu0 0.0
    %609 = vmatpush2.msra.mxu0 0.0
    %610 = vmatprep.subr.mxu0 0.0
    %611 = vmatpush2.msra.mxu0 0.0
    %612 = vmatprep.mubr.f32.mxu0 0.0
    %613 = vmatmul.mubr.f32.gmra.mxu0 %v546
    %v614 = vpop.f32.mrf.mxu0
    %v615 = vadd.f32 %v541, %v614
    %v616 = vpop.f32.mrf.mxu0
    %617 = vdwg.mxu0
    %vm618 = vcmask 25600
    %v619 = vsel %vm618, %v615, -inf
    %620 = vmax.xlane.f32.xlu0 %v619
    %v621 = vpop.xlane.xlu0 %620
    %v622 = vsub.f32 %v615, %v621
    %v623 = vmul.f32 %v622, 1.442695
    %v624 = vpow.pop %v623
    %v625 = vsel %vm618, %v624, 0.0
    %626 = vadd.xlane.f32.xlu0 %v625
    %v627 = vpop.xlane.xlu0 %626
    %v628 = vlog2.pop %v627
    %v629 = vmul.f32 %v628, 0.6931472
    %v630 = vsub.f32 %v622, %v629
    %631 = vst.msk [vmem:[#allocation7] sm:$0x3] %vm618, %v630
    // Predicated region
    $region30: #{tpu_custom_call.1} parent=1 // pred_check
      _
    $region31: #{tpu_custom_call.1} parent=1 // pred_check_branch
      %633 = sbr.rel (0) target = $region33
    $region32: #{tpu_custom_call.1} parent=1 // pred_region
      %s635 = ssub.s32 32, 32
      %636 = vsyncadd [#allocation4], %s635
      %s638 = sshll.u32 [#allocation7], 4
      %s639 = int_to_ptr.vmem [resolvable:$true] %s638
      %641 = dma.vmem_to_hbm [thread:$0]  %s639, 32, %s5, [#allocation4]
    $region33: #{tpu_custom_call.1} parent=1 // pred_fallthru
      _
    // Predicated region
    $region34: #{tpu_custom_call.1} parent=1 // pred_check
      _
    $region35: #{tpu_custom_call.1} parent=1 // pred_check_branch
      %643 = sbr.rel (0) target = $region37
    $region36: #{tpu_custom_call.1} parent=1 // pred_region
      %644 = dma.done [#allocation4], 32
    $region37: #{tpu_custom_call.1} parent=1 // pred_fallthru
      _
    %645 = vsyncpa [#allocation3], 1
    %646 = vsyncpa [#allocation6], 1
    %647 = vsyncpa [#allocation4], 1

</llo_original>
